<compile_context>
chip_gen: v7x
topology: tpu7x:2x2x1
jax: 0.10.0
libtpu: 0.0.40
codegen_flags: <defaults>
</compile_context>

<pallas_src>
import jax
import jax.numpy as jnp
from jax.experimental import pallas as pl
from jax.experimental.pallas import tpu as pltpu

_LANE = 128
_SUBLANE = 8


def _round_up(x, m):
    return (x + m - 1) // m * m


def _gelu(x):
    # TODO(synk): torch.nn.GELU default is the exact erf form; the tanh
    # approximation used here differs by < ~1e-3 in activation value.
    return jax.nn.gelu(x, approximate=True)


def critic_kernel(obs_ref, act_ref,
                  w1o_ref, w1a_ref, b1_ref,
                  w2_ref, b2_ref,
                  w3_ref, b3_ref,
                  out_ref):
    # Layer 1: split matmul replaces concat([obs, act], -1) @ W1.
    h1 = (jnp.dot(obs_ref[...], w1o_ref[...], preferred_element_type=jnp.float32)
          + jnp.dot(act_ref[...], w1a_ref[...], preferred_element_type=jnp.float32)
          + b1_ref[...])
    h1 = _gelu(h1)

    # Layer 2: Linear + GELU.
    h2 = _gelu(jnp.dot(h1, w2_ref[...], preferred_element_type=jnp.float32)
               + b2_ref[...])

    # Output layer (H2 -> 1): VPU multiply + lane reduction.  The (tm,) result
    # is relaid out to a lane-dense (1, tm) row (XLU slot has slack here) so
    # the store/writeback is dense instead of tm/8 masked single-lane stores.
    q = jnp.sum(h2 * w3_ref[...], axis=-1)[None, :] + b3_ref[...]   # (1, tm)
    out_ref[0] = q.astype(out_ref.dtype)


def prepare_critic_params(params, obs_dim):
    """One-time prep: split W1 at the concat boundary, reshape W3/biases to
    row vectors and zero-pad hidden (lane) dims to multiples of 128.
    Call once (outside the per-step forward path) and reuse the result."""
    (w1, b1), (w2, b2), (w3, b3) = params
    h1, h2 = w1.shape[1], w2.shape[1]
    h1p, h2p = _round_up(h1, _LANE), _round_up(h2, _LANE)

    w1 = jnp.pad(w1, ((0, 0), (0, h1p - h1)))
    b1 = jnp.pad(b1.reshape(1, -1), ((0, 0), (0, h1p - h1)))
    w2 = jnp.pad(w2, ((0, h1p - h1), (0, h2p - h2)))
    b2 = jnp.pad(b2.reshape(1, -1), ((0, 0), (0, h2p - h2)))
    w3_row = jnp.pad(w3.reshape(1, -1), ((0, 0), (0, h2p - h2)))   # [1, H2p]
    b3 = b3.reshape(1, 1)

    return (w1[:obs_dim], w1[obs_dim:], b1, w2, b2, w3_row, b3)


def _choose_tile(batch, block_b):
    """Batch tile: multiple of 8, lane-dense (multiple of 128) whenever the
    grid has >1 step, and sized so that moderate batches still produce >=2
    grid steps (both TensorCores used on v7x)."""
    if batch <= _SUBLANE:
        return max(batch, 1)
    block_b = max(_LANE, _round_up(block_b, _LANE))
    target = max(_LANE, _round_up(pl.cdiv(batch, 2), _LANE))
    return min(block_b, target, _round_up(batch, _SUBLANE))


def critic_forward(obs, act, prepared_params, *, block_b=512):
    """Fused Critic forward pass as a single batch-tiled Pallas call.

    `prepared_params` must come from prepare_critic_params() (hoisted out of
    the per-call path).  `block_b` is the max batch tile; sweep 512-2048 per
    chip generation if tuning."""
    obs = jnp.asarray(obs, jnp.float32)
    act = jnp.asarray(act, jnp.float32)
    B, obs_dim = obs.shape
    act_dim = act.shape[1]

    w1_obs, w1_act, b1, w2, b2, w3_row, b3 = prepared_params

    tm = _choose_tile(B, block_b)
    g = pl.cdiv(B, tm)          # ragged last block handled by Pallas, no pad

    def batch_spec(cols):
        return pl.BlockSpec((tm, cols), lambda i: (i, 0))

    def resident(arr):
        # Full array in VMEM, same block every grid step (fetched once).
        return pl.BlockSpec(arr.shape, lambda i: (0, 0))

    out = pl.pallas_call(
        critic_kernel,
        out_shape=jax.ShapeDtypeStruct((g, 1, tm), jnp.float32),
        grid=(g,),
        in_specs=[
            batch_spec(obs_dim), batch_spec(act_dim),
            resident(w1_obs), resident(w1_act), resident(b1),
            resident(w2), resident(b2),
            resident(w3_row), resident(b3),
        ],
        out_specs=pl.BlockSpec((1, 1, tm), lambda i: (i, 0, 0)),
        compiler_params=pltpu.CompilerParams(
            dimension_semantics=("parallel",)),
    )(obs, act, w1_obs, w1_act, b1, w2, b2, w3_row, b3)

    # (g, 1, tm) row-major -> flat batch order; drop padded tail rows.
    return out.reshape(g * tm)[:B].reshape(B, 1)


def init_critic_params(key, obs_dim, act_dim, hidden_dims=(32, 32)):
    """Deterministic synthetic init matching the torch module's shapes
    (weights stored [in, out], biases [out])."""
    dims = [obs_dim + act_dim] + list(hidden_dims) + [1]
    params = []
    for j in range(len(dims) - 1):
        key, kw, kb = jax.random.split(key, 3)
        bound = 1.0 / (dims[j] ** 0.5)
        w = jax.random.uniform(kw, (dims[j], dims[j + 1]), jnp.float32, -bound, bound)
        b = jax.random.uniform(kb, (dims[j + 1],), jnp.float32, -bound, bound)
        params.append((w, b))
    return params


def critic_reference(obs, act, params):
    """Pure-JAX reference of the same forward pass."""
    (w1, b1), (w2, b2), (w3, b3) = params
    x = jnp.concatenate([obs, act], axis=-1)
    x = _gelu(x @ w1 + b1)
    x = _gelu(x @ w2 + b2)
    return x @ w3 + b3


if __name__ == "__main__":
    key = jax.random.PRNGKey(0)
    k_obs, k_act, k_params = jax.random.split(key, 3)

    # Small shapes consistent with the module: obs_dim=12, action_dim=4,
    # hidden_dims=(32, 32), batch=8.
    B, OBS_DIM, ACT_DIM = 8, 12, 4
    HIDDEN = (32, 32)

    obs = jax.random.normal(k_obs, (B, OBS_DIM), jnp.float32)
    act = jax.random.normal(k_act, (B, ACT_DIM), jnp.float32)
    params = init_critic_params(k_params, OBS_DIM, ACT_DIM, HIDDEN)

    # Parameter prep is done ONCE here (hoisted out of the per-call path).
    prepared = prepare_critic_params(params, OBS_DIM)

    q = jax.block_until_ready(critic_forward(obs, act, prepared))
    q_ref = critic_reference(obs, act, params)
    assert q.shape == (B, 1), q.shape
    assert jnp.allclose(q, q_ref, atol=1e-5, rtol=1e-5), (q, q_ref)

    # Larger ragged batch exercises the multi-step grid (2 tiles on v7x both
    # cores) and the unpadded partial last block path.
    B2 = 300
    k_obs2, k_act2 = jax.random.split(key)
    obs2 = jax.random.normal(k_obs2, (B2, OBS_DIM), jnp.float32)
    act2 = jax.random.normal(k_act2, (B2, ACT_DIM), jnp.float32)
    q2 = jax.block_until_ready(critic_forward(obs2, act2, prepared))
    q2_ref = critic_reference(obs2, act2, params)
    assert q2.shape == (B2, 1), q2.shape
    assert jnp.allclose(q2, q2_ref, atol=1e-5, rtol=1e-5)

    print("KERNEL_OK")
</pallas_src>

<mosaic_0001>
module attributes {stable_mosaic.version = 11 : i64} {
  func.func @critic_kernel(%arg0: i32, %arg1: memref<8x12xf32, #tpu.memory_space<vmem>>, %arg2: memref<8x4xf32, #tpu.memory_space<vmem>>, %arg3: memref<12x128xf32, #tpu.memory_space<vmem>>, %arg4: memref<4x128xf32, #tpu.memory_space<vmem>>, %arg5: memref<1x128xf32, #tpu.memory_space<vmem>>, %arg6: memref<128x128xf32, #tpu.memory_space<vmem>>, %arg7: memref<1x128xf32, #tpu.memory_space<vmem>>, %arg8: memref<1x128xf32, #tpu.memory_space<vmem>>, %arg9: memref<1x1xf32, #tpu.memory_space<vmem>>, %arg10: memref<1x1x8xf32, #tpu.memory_space<vmem>>) attributes {dimension_semantics = [#tpu.dimension_semantics<parallel>], iteration_bounds = array<i64: 1>, scalar_prefetch = 0 : i64, scratch_operands = 0 : i64, tpu.core_type = #tpu.core_type<tc>, window_params = [{transform_indices = @transform_0, window_bounds = array<i64: 8, 12>}, {transform_indices = @transform_1, window_bounds = array<i64: 8, 4>}, {pipeline_mode = #tpu.pipeline_mode<synchronous>, transform_indices = @transform_2, window_bounds = array<i64: 12, 128>}, {pipeline_mode = #tpu.pipeline_mode<synchronous>, transform_indices = @transform_3, window_bounds = array<i64: 4, 128>}, {pipeline_mode = #tpu.pipeline_mode<synchronous>, transform_indices = @transform_4, window_bounds = array<i64: 1, 128>}, {pipeline_mode = #tpu.pipeline_mode<synchronous>, transform_indices = @transform_5, window_bounds = array<i64: 128, 128>}, {pipeline_mode = #tpu.pipeline_mode<synchronous>, transform_indices = @transform_6, window_bounds = array<i64: 1, 128>}, {pipeline_mode = #tpu.pipeline_mode<synchronous>, transform_indices = @transform_7, window_bounds = array<i64: 1, 128>}, {pipeline_mode = #tpu.pipeline_mode<synchronous>, transform_indices = @transform_8, window_bounds = array<i64: 1, 1>}, {transform_indices = @transform_9, window_bounds = array<i64: 1, 1, 8>}]} {
    %c0 = arith.constant 0 : index
    %c0_0 = arith.constant 0 : index
    %0 = vector.load %arg1[%c0, %c0_0] : memref<8x12xf32, #tpu.memory_space<vmem>>, vector<8x12xf32>
    %c0_1 = arith.constant 0 : index
    %c0_2 = arith.constant 0 : index
    %1 = vector.load %arg3[%c0_1, %c0_2] : memref<12x128xf32, #tpu.memory_space<vmem>>, vector<12x128xf32>
    %cst = arith.constant dense<0.000000e+00> : vector<8x128xf32>
    %2 = tpu.matmul %0, %1, %cst {dimension_numbers = #tpu.dot_dimension_numbers<[1], [0], [0], [1], [0, 0, 1, 1], [], []>} : vector<8x12xf32>, vector<12x128xf32>, vector<8x128xf32> -> vector<8x128xf32>
    %c0_3 = arith.constant 0 : index
    %c0_4 = arith.constant 0 : index
    %3 = vector.load %arg2[%c0_3, %c0_4] : memref<8x4xf32, #tpu.memory_space<vmem>>, vector<8x4xf32>
    %c0_5 = arith.constant 0 : index
    %c0_6 = arith.constant 0 : index
    %4 = vector.load %arg4[%c0_5, %c0_6] : memref<4x128xf32, #tpu.memory_space<vmem>>, vector<4x128xf32>
    %cst_7 = arith.constant dense<0.000000e+00> : vector<8x128xf32>
    %5 = tpu.matmul %3, %4, %cst_7 {dimension_numbers = #tpu.dot_dimension_numbers<[1], [0], [0], [1], [0, 0, 1, 1], [], []>} : vector<8x4xf32>, vector<4x128xf32>, vector<8x128xf32> -> vector<8x128xf32>
    %6 = arith.addf %2, %5 : vector<8x128xf32>
    %c0_8 = arith.constant 0 : index
    %c0_9 = arith.constant 0 : index
    %7 = vector.load %arg5[%c0_8, %c0_9] : memref<1x128xf32, #tpu.memory_space<vmem>>, vector<1x128xf32>
    %8 = vector.broadcast %7 : vector<1x128xf32> to vector<8x128xf32>
    %9 = arith.addf %6, %8 : vector<8x128xf32>
    %10 = arith.mulf %9, %9 : vector<8x128xf32>
    %11 = arith.mulf %9, %10 : vector<8x128xf32>
    %cst_10 = arith.constant 4.471500e-02 : f32
    %12 = vector.broadcast %cst_10 : f32 to vector<8x128xf32>
    %13 = arith.mulf %12, %11 : vector<8x128xf32>
    %14 = arith.addf %9, %13 : vector<8x128xf32>
    %cst_11 = arith.constant 0.797884583 : f32
    %15 = vector.broadcast %cst_11 : f32 to vector<8x128xf32>
    %16 = arith.mulf %15, %14 : vector<8x128xf32>
    %17 = math.tanh %16 : vector<8x128xf32>
    %cst_12 = arith.constant 1.000000e+00 : f32
    %18 = vector.broadcast %cst_12 : f32 to vector<8x128xf32>
    %19 = arith.addf %18, %17 : vector<8x128xf32>
    %cst_13 = arith.constant 5.000000e-01 : f32
    %20 = vector.broadcast %cst_13 : f32 to vector<8x128xf32>
    %21 = arith.mulf %20, %19 : vector<8x128xf32>
    %22 = arith.mulf %9, %21 : vector<8x128xf32>
    %c0_14 = arith.constant 0 : index
    %c0_15 = arith.constant 0 : index
    %23 = vector.load %arg6[%c0_14, %c0_15] : memref<128x128xf32, #tpu.memory_space<vmem>>, vector<128x128xf32>
    %cst_16 = arith.constant dense<0.000000e+00> : vector<8x128xf32>
    %24 = tpu.matmul %22, %23, %cst_16 {dimension_numbers = #tpu.dot_dimension_numbers<[1], [0], [0], [1], [0, 0, 1, 1], [], []>} : vector<8x128xf32>, vector<128x128xf32>, vector<8x128xf32> -> vector<8x128xf32>
    %c0_17 = arith.constant 0 : index
    %c0_18 = arith.constant 0 : index
    %25 = vector.load %arg7[%c0_17, %c0_18] : memref<1x128xf32, #tpu.memory_space<vmem>>, vector<1x128xf32>
    %26 = vector.broadcast %25 : vector<1x128xf32> to vector<8x128xf32>
    %27 = arith.addf %24, %26 : vector<8x128xf32>
    %28 = arith.mulf %27, %27 : vector<8x128xf32>
    %29 = arith.mulf %27, %28 : vector<8x128xf32>
    %cst_19 = arith.constant 4.471500e-02 : f32
    %30 = vector.broadcast %cst_19 : f32 to vector<8x128xf32>
    %31 = arith.mulf %30, %29 : vector<8x128xf32>
    %32 = arith.addf %27, %31 : vector<8x128xf32>
    %cst_20 = arith.constant 0.797884583 : f32
    %33 = vector.broadcast %cst_20 : f32 to vector<8x128xf32>
    %34 = arith.mulf %33, %32 : vector<8x128xf32>
    %35 = math.tanh %34 : vector<8x128xf32>
    %cst_21 = arith.constant 1.000000e+00 : f32
    %36 = vector.broadcast %cst_21 : f32 to vector<8x128xf32>
    %37 = arith.addf %36, %35 : vector<8x128xf32>
    %cst_22 = arith.constant 5.000000e-01 : f32
    %38 = vector.broadcast %cst_22 : f32 to vector<8x128xf32>
    %39 = arith.mulf %38, %37 : vector<8x128xf32>
    %40 = arith.mulf %27, %39 : vector<8x128xf32>
    %c0_23 = arith.constant 0 : index
    %c0_24 = arith.constant 0 : index
    %41 = vector.load %arg8[%c0_23, %c0_24] : memref<1x128xf32, #tpu.memory_space<vmem>>, vector<1x128xf32>
    %42 = vector.broadcast %41 : vector<1x128xf32> to vector<8x128xf32>
    %43 = arith.mulf %40, %42 : vector<8x128xf32>
    %cst_25 = arith.constant dense<0.000000e+00> : vector<8xf32>
    %44 = vector.multi_reduction <add>, %43, %cst_25 [1] : vector<8x128xf32> to vector<8xf32>
    %45 = vector.shape_cast %44 : vector<8xf32> to vector<1x8xf32>
    %c0_26 = arith.constant 0 : index
    %c0_27 = arith.constant 0 : index
    %46 = vector.load %arg9[%c0_26, %c0_27] : memref<1x1xf32, #tpu.memory_space<vmem>>, vector<1x1xf32>
    %47 = vector.broadcast %46 : vector<1x1xf32> to vector<1x8xf32>
    %48 = arith.addf %45, %47 : vector<1x8xf32>
    %c0_28 = arith.constant 0 : index
    %c0_29 = arith.constant 0 : index
    %c0_30 = arith.constant 0 : index
    %49 = vector.load %arg10[%c0_28, %c0_29, %c0_30] : memref<1x1x8xf32, #tpu.memory_space<vmem>>, vector<1x1x8xf32>
    %50 = vector.shape_cast %49 : vector<1x1x8xf32> to vector<1x8xf32>
    %51 = vector.shape_cast %48 : vector<1x8xf32> to vector<1x1x8xf32>
    tpu.vector_store %arg10[%c0_28, %c0_29, %c0_30], %51 {strides = array<i32>} : memref<1x1x8xf32, #tpu.memory_space<vmem>>, vector<1x1x8xf32>,
    return
  }
  func.func @transform_0(%arg0: i32) -> (i32, i32) {
    %c0_i32 = arith.constant 0 : i32
    %c0_i32_0 = arith.constant 0 : i32
    return %arg0, %c0_i32 : i32, i32
  }
  func.func @transform_1(%arg0: i32) -> (i32, i32) {
    %c0_i32 = arith.constant 0 : i32
    %c0_i32_0 = arith.constant 0 : i32
    return %arg0, %c0_i32 : i32, i32
  }
  func.func @transform_2(%arg0: i32) -> (i32, i32) {
    %c0_i32 = arith.constant 0 : i32
    %c0_i32_0 = arith.constant 0 : i32
    %c0_i32_1 = arith.constant 0 : i32
    return %c0_i32, %c0_i32_0 : i32, i32
  }
  func.func @transform_3(%arg0: i32) -> (i32, i32) {
    %c0_i32 = arith.constant 0 : i32
    %c0_i32_0 = arith.constant 0 : i32
    %c0_i32_1 = arith.constant 0 : i32
    return %c0_i32, %c0_i32_0 : i32, i32
  }
  func.func @transform_4(%arg0: i32) -> (i32, i32) {
    %c0_i32 = arith.constant 0 : i32
    %c0_i32_0 = arith.constant 0 : i32
    %c0_i32_1 = arith.constant 0 : i32
    return %c0_i32, %c0_i32_0 : i32, i32
  }
  func.func @transform_5(%arg0: i32) -> (i32, i32) {
    %c0_i32 = arith.constant 0 : i32
    %c0_i32_0 = arith.constant 0 : i32
    %c0_i32_1 = arith.constant 0 : i32
    return %c0_i32, %c0_i32_0 : i32, i32
  }
  func.func @transform_6(%arg0: i32) -> (i32, i32) {
    %c0_i32 = arith.constant 0 : i32
    %c0_i32_0 = arith.constant 0 : i32
    %c0_i32_1 = arith.constant 0 : i32
    return %c0_i32, %c0_i32_0 : i32, i32
  }
  func.func @transform_7(%arg0: i32) -> (i32, i32) {
    %c0_i32 = arith.constant 0 : i32
    %c0_i32_0 = arith.constant 0 : i32
    %c0_i32_1 = arith.constant 0 : i32
    return %c0_i32, %c0_i32_0 : i32, i32
  }
  func.func @transform_8(%arg0: i32) -> (i32, i32) {
    %c0_i32 = arith.constant 0 : i32
    %c0_i32_0 = arith.constant 0 : i32
    %c0_i32_1 = arith.constant 0 : i32
    return %c0_i32, %c0_i32_0 : i32, i32
  }
  func.func @transform_9(%arg0: i32) -> (i32, i32, i32) {
    %c0_i32 = arith.constant 0 : i32
    %c0_i32_0 = arith.constant 0 : i32
    %c0_i32_1 = arith.constant 0 : i32
    return %arg0, %c0_i32, %c0_i32_0 : i32, i32, i32
  }
}

</mosaic_0001>

<llo_original>
// kernel: tpu_custom_call.1
$region0: #{tpu_custom_call.1}
  #allocation0 [shape = 'u32[]', space=smem, size = 0x4, offset = 0x4, fixed_abs, tag = 'smem constant byte address 0x4 - core index']
  #allocation1 [shape = 'u32[144,128]{1,0:T(1,128)}', space=vmem, size = 0x12000, scoped, tag = 'internal scratch']
  #allocation2 [shape = 'f32[1,1]{1,0:T(1,128)S(1)}', space=vmem, size = 0x200, scoped, tag = 'scoped memory for tpu_custom_call.1']
  %s0 = inlined_call_operand.hbm [shape: f32[8,12], index: 0, kind: input, shape index: {}]
  %s1 = inlined_call_operand.vmem [shape: f32[8,4], index: 1, kind: input, shape index: {}]
  %s2 = inlined_call_operand.vmem [shape: f32[12,128], index: 2, kind: input, shape index: {}]
  %s3 = inlined_call_operand.vmem [shape: f32[4,128], index: 3, kind: input, shape index: {}]
  %s4 = inlined_call_operand.vmem [shape: f32[1,128], index: 4, kind: input, shape index: {}]
  %s5 = inlined_call_operand.hbm [shape: f32[128,128], index: 5, kind: input, shape index: {}]
  %s6 = inlined_call_operand.vmem [shape: f32[1,128], index: 6, kind: input, shape index: {}]
  %s7 = inlined_call_operand.vmem [shape: f32[1,128], index: 7, kind: input, shape index: {}]
  %s8 = inlined_call_operand.<no memory space> [shape: f32[1,1], index: 8, kind: input, shape index: {}]
  %s9 = inlined_call_operand.hbm [shape: f32[1,1,8], index: 9, kind: output, shape index: {}]
  %s10 = sld [smem:[#allocation0]]
  $region54: #{tpu_custom_call.1} parent=0
    _
  %s12 = ssub.s32 1, %s10
  %s13 = scalar_select 0, %s12, %s10
  %v14 = vstv %s8
  %15 = vst [vmem:[#allocation2] sm:$0x1] %v14
  $region1: #{tpu_custom_call.1} parent=0
    #allocation3 [shape = 'u8[4096]{0}', space=vmem, size = 0x1000, scoped, tag = 'input window, operand 0, single buffered']
    #allocation4 [shape = 's32[1]{0}', space=sflag, size = 0x4, scoped, tag = 'scoped memory for tpu_custom_call.1']
    #allocation5 [shape = 's32[1]{0}', space=sflag, size = 0x4, scoped, tag = 'scoped memory for tpu_custom_call.1']
    #allocation6 [shape = 'u8[65536]{0}', space=vmem, size = 0x10000, scoped, tag = 'input window, operand 5, single buffered']
    #allocation7 [shape = 's32[1]{0}', space=sflag, size = 0x4, scoped, tag = 'scoped memory for tpu_custom_call.1']
    #allocation8 [shape = 'u8[512]{0}', space=vmem, size = 0x400, scoped, tag = 'output window, operand 0, single buffered']
    %16 = vsyncpa [#allocation4], 0
    %17 = vsyncpa [#allocation7], 0
    %18 = vsyncpa [#allocation5], 0
    // Predicated region
    $region2: #{tpu_custom_call.1} parent=1 // pred_check
      _
    $region3: #{tpu_custom_call.1} parent=1 // pred_check_branch
      %20 = sbr.rel (0) target = $region5
    $region4: #{tpu_custom_call.1} parent=1 // pred_region
      %s22 = ssub.s32 128, 128
      %23 = vsyncadd [#allocation4], %s22
      %s25 = sshll.u32 [#allocation3], 4
      %s26 = int_to_ptr.vmem [resolvable:$true] %s25
      %28 = dma.hbm_to_vmem [thread:$0]  %s0, 128, %s26, [#allocation4]
    $region5: #{tpu_custom_call.1} parent=1 // pred_fallthru
      _
    // Predicated region
    $region6: #{tpu_custom_call.1} parent=1 // pred_check
      _
    $region7: #{tpu_custom_call.1} parent=1 // pred_check_branch
      %30 = sbr.rel (0) target = $region9
    $region8: #{tpu_custom_call.1} parent=1 // pred_region
      _
    $region9: #{tpu_custom_call.1} parent=1 // pred_fallthru
      _
    // Predicated region
    $region10: #{tpu_custom_call.1} parent=1 // pred_check
      _
    $region11: #{tpu_custom_call.1} parent=1 // pred_check_branch
      %32 = sbr.rel (0) target = $region13
    $region12: #{tpu_custom_call.1} parent=1 // pred_region
      _
    $region13: #{tpu_custom_call.1} parent=1 // pred_fallthru
      _
    // Predicated region
    $region14: #{tpu_custom_call.1} parent=1 // pred_check
      _
    $region15: #{tpu_custom_call.1} parent=1 // pred_check_branch
      %34 = sbr.rel (0) target = $region17
    $region16: #{tpu_custom_call.1} parent=1 // pred_region
      _
    $region17: #{tpu_custom_call.1} parent=1 // pred_fallthru
      _
    // Predicated region
    $region18: #{tpu_custom_call.1} parent=1 // pred_check
      _
    $region19: #{tpu_custom_call.1} parent=1 // pred_check_branch
      %36 = sbr.rel (0) target = $region21
    $region20: #{tpu_custom_call.1} parent=1 // pred_region
      _
    $region21: #{tpu_custom_call.1} parent=1 // pred_fallthru
      _
    // Predicated region
    $region22: #{tpu_custom_call.1} parent=1 // pred_check
      _
    $region23: #{tpu_custom_call.1} parent=1 // pred_check_branch
      %38 = sbr.rel (0) target = $region25
    $region24: #{tpu_custom_call.1} parent=1 // pred_region
      %s40 = ssub.s32 2048, 2048
      %41 = vsyncadd [#allocation7], %s40
      %s42 = sshll.u32 [#allocation6], 4
      %s43 = int_to_ptr.vmem [resolvable:$true] %s42
      %48 = dma.hbm_to_vmem [thread:$0]  %s5, 2048, %s43, [#allocation7], 128, 128, 8
    $region25: #{tpu_custom_call.1} parent=1 // pred_fallthru
      _
    // Predicated region
    $region26: #{tpu_custom_call.1} parent=1 // pred_check
      _
    $region27: #{tpu_custom_call.1} parent=1 // pred_check_branch
      %50 = sbr.rel (0) target = $region29
    $region28: #{tpu_custom_call.1} parent=1 // pred_region
      _
    $region29: #{tpu_custom_call.1} parent=1 // pred_fallthru
      _
    // Predicated region
    $region30: #{tpu_custom_call.1} parent=1 // pred_check
      _
    $region31: #{tpu_custom_call.1} parent=1 // pred_check_branch
      %52 = sbr.rel (0) target = $region33
    $region32: #{tpu_custom_call.1} parent=1 // pred_region
      _
    $region33: #{tpu_custom_call.1} parent=1 // pred_fallthru
      _
    // Predicated region
    $region34: #{tpu_custom_call.1} parent=1 // pred_check
      _
    $region35: #{tpu_custom_call.1} parent=1 // pred_check_branch
      %54 = sbr.rel (0) target = $region37
    $region36: #{tpu_custom_call.1} parent=1 // pred_region
      _
    $region37: #{tpu_custom_call.1} parent=1 // pred_fallthru
      _
    // Predicated region
    $region38: #{tpu_custom_call.1} parent=1 // pred_check
      _
    $region39: #{tpu_custom_call.1} parent=1 // pred_check_branch
      %56 = sbr.rel (0) target = $region41
    $region40: #{tpu_custom_call.1} parent=1 // pred_region
      %57 = dma.done [#allocation4], 128
    $region41: #{tpu_custom_call.1} parent=1 // pred_fallthru
      _
    // Predicated region
    $region42: #{tpu_custom_call.1} parent=1 // pred_check
      _
    $region43: #{tpu_custom_call.1} parent=1 // pred_check_branch
      %59 = sbr.rel (0) target = $region45
    $region44: #{tpu_custom_call.1} parent=1 // pred_region
      %60 = dma.done [#allocation7], 2048
    $region45: #{tpu_custom_call.1} parent=1 // pred_fallthru
      _
    %v61 = vld [vmem:[#allocation3] sm:$0xff]
    %v62 = vld [vmem:[%s2] sm:$0xff]
    %v63 = vld [vmem:[%s2 + $0x8] sm:$0xf]
    %v64 = vld [vmem:[%s1] sm:$0xff]
    %v65 = vld [vmem:[%s3] sm:$0xf]
    %vm66 = vcmask 31744
    %v68 = vsel %vm66, %v64, 0
    %vm70 = vcmask 1043456
    %v72 = vsel %vm70, %v65, 0
    %74 = vmatprep.subr.mxu0 0.0
    %75 = vmatpush1.msra.mxu0 %v72
    %76 = vmatprep.subr.mxu0 0.0
    %77 = vmatpush1.msra.mxu0 0.0
    %78 = vmatprep.subr.mxu0 0.0
    %79 = vmatpush1.msra.mxu0 0.0
    %80 = vmatprep.subr.mxu0 0.0
    %81 = vmatpush1.msra.mxu0 0.0
    %82 = vmatprep.subr.mxu0 0.0
    %83 = vmatpush1.msra.mxu0 0.0
    %84 = vmatprep.subr.mxu0 0.0
    %85 = vmatpush1.msra.mxu0 0.0
    %86 = vmatprep.subr.mxu0 0.0
    %87 = vmatpush1.msra.mxu0 0.0
    %88 = vmatprep.subr.mxu0 0.0
    %89 = vmatpush1.msra.mxu0 0.0
    %90 = vmatprep.subr.mxu0 0.0
    %91 = vmatpush1.msra.mxu0 0.0
    %92 = vmatprep.subr.mxu0 0.0
    %93 = vmatpush1.msra.mxu0 0.0
    %94 = vmatprep.subr.mxu0 0.0
    %95 = vmatpush1.msra.mxu0 0.0
    %96 = vmatprep.subr.mxu0 0.0
    %97 = vmatpush1.msra.mxu0 0.0
    %98 = vmatprep.subr.mxu0 0.0
    %99 = vmatpush1.msra.mxu0 0.0
    %100 = vmatprep.subr.mxu0 0.0
    %101 = vmatpush1.msra.mxu0 0.0
    %102 = vmatprep.subr.mxu0 0.0
    %103 = vmatpush1.msra.mxu0 0.0
    %104 = vmatprep.subr.mxu0 0.0
    %105 = vmatpush1.msra.mxu0 0.0
    %106 = vmatprep.subr.mxu0 0.0
    %107 = vmatpush1.msra.mxu0 0.0
    %108 = vmatprep.subr.mxu0 0.0
    %109 = vmatpush1.msra.mxu0 0.0
    %110 = vmatprep.subr.mxu0 0.0
    %111 = vmatpush1.msra.mxu0 0.0
    %112 = vmatprep.subr.mxu0 0.0
    %113 = vmatpush1.msra.mxu0 0.0
    %114 = vmatprep.subr.mxu0 0.0
    %115 = vmatpush1.msra.mxu0 0.0
    %116 = vmatprep.subr.mxu0 0.0
    %117 = vmatpush1.msra.mxu0 0.0
    %118 = vmatprep.subr.mxu0 0.0
    %119 = vmatpush1.msra.mxu0 0.0
    %120 = vmatprep.subr.mxu0 0.0
    %121 = vmatpush1.msra.mxu0 0.0
    %122 = vmatprep.subr.mxu0 0.0
    %123 = vmatpush1.msra.mxu0 0.0
    %124 = vmatprep.subr.mxu0 0.0
    %125 = vmatpush1.msra.mxu0 0.0
    %126 = vmatprep.subr.mxu0 0.0
    %127 = vmatpush1.msra.mxu0 0.0
    %128 = vmatprep.subr.mxu0 0.0
    %129 = vmatpush1.msra.mxu0 0.0
    %130 = vmatprep.subr.mxu0 0.0
    %131 = vmatpush1.msra.mxu0 0.0
    %132 = vmatprep.subr.mxu0 0.0
    %133 = vmatpush1.msra.mxu0 0.0
    %134 = vmatprep.subr.mxu0 0.0
    %135 = vmatpush1.msra.mxu0 0.0
    %136 = vmatprep.subr.mxu0 0.0
    %137 = vmatpush1.msra.mxu0 0.0
    %138 = vmatprep.mubr.f32.mxu0 0.0
    %139 = vmatmul.mubr.f32.gmra.mrb[0].mxu0 %v68
    %v140 = vpop.f32.mrb[0].mxu0
    %v141 = vadd.f32 0.0, %v140
    %v142 = vpop.f32.mrb[0].mxu0
    %143 = vdwg.mxu0
    %vm144 = vcmask 97280
    %v146 = vsel %vm144, %v61, 0
    %v149 = vsel %vm70, %v63, 0
    %151 = vmatprep.subr.mxu0 0.0
    %152 = vmatpush1.msra.mxu0 %v62
    %153 = vmatprep.subr.mxu0 0.0
    %154 = vmatpush1.msra.mxu0 %v149
    %155 = vmatprep.subr.mxu0 0.0
    %156 = vmatpush1.msra.mxu0 0.0
    %157 = vmatprep.subr.mxu0 0.0
    %158 = vmatpush1.msra.mxu0 0.0
    %159 = vmatprep.subr.mxu0 0.0
    %160 = vmatpush1.msra.mxu0 0.0
    %161 = vmatprep.subr.mxu0 0.0
    %162 = vmatpush1.msra.mxu0 0.0
    %163 = vmatprep.subr.mxu0 0.0
    %164 = vmatpush1.msra.mxu0 0.0
    %165 = vmatprep.subr.mxu0 0.0
    %166 = vmatpush1.msra.mxu0 0.0
    %167 = vmatprep.subr.mxu0 0.0
    %168 = vmatpush1.msra.mxu0 0.0
    %169 = vmatprep.subr.mxu0 0.0
    %170 = vmatpush1.msra.mxu0 0.0
    %171 = vmatprep.subr.mxu0 0.0
    %172 = vmatpush1.msra.mxu0 0.0
    %173 = vmatprep.subr.mxu0 0.0
    %174 = vmatpush1.msra.mxu0 0.0
    %175 = vmatprep.subr.mxu0 0.0
    %176 = vmatpush1.msra.mxu0 0.0
    %177 = vmatprep.subr.mxu0 0.0
    %178 = vmatpush1.msra.mxu0 0.0
    %179 = vmatprep.subr.mxu0 0.0
    %180 = vmatpush1.msra.mxu0 0.0
    %181 = vmatprep.subr.mxu0 0.0
    %182 = vmatpush1.msra.mxu0 0.0
    %183 = vmatprep.subr.mxu0 0.0
    %184 = vmatpush1.msra.mxu0 0.0
    %185 = vmatprep.subr.mxu0 0.0
    %186 = vmatpush1.msra.mxu0 0.0
    %187 = vmatprep.subr.mxu0 0.0
    %188 = vmatpush1.msra.mxu0 0.0
    %189 = vmatprep.subr.mxu0 0.0
    %190 = vmatpush1.msra.mxu0 0.0
    %191 = vmatprep.subr.mxu0 0.0
    %192 = vmatpush1.msra.mxu0 0.0
    %193 = vmatprep.subr.mxu0 0.0
    %194 = vmatpush1.msra.mxu0 0.0
    %195 = vmatprep.subr.mxu0 0.0
    %196 = vmatpush1.msra.mxu0 0.0
    %197 = vmatprep.subr.mxu0 0.0
    %198 = vmatpush1.msra.mxu0 0.0
    %199 = vmatprep.subr.mxu0 0.0
    %200 = vmatpush1.msra.mxu0 0.0
    %201 = vmatprep.subr.mxu0 0.0
    %202 = vmatpush1.msra.mxu0 0.0
    %203 = vmatprep.subr.mxu0 0.0
    %204 = vmatpush1.msra.mxu0 0.0
    %205 = vmatprep.subr.mxu0 0.0
    %206 = vmatpush1.msra.mxu0 0.0
    %207 = vmatprep.subr.mxu0 0.0
    %208 = vmatpush1.msra.mxu0 0.0
    %209 = vmatprep.subr.mxu0 0.0
    %210 = vmatpush1.msra.mxu0 0.0
    %211 = vmatprep.subr.mxu0 0.0
    %212 = vmatpush1.msra.mxu0 0.0
    %213 = vmatprep.subr.mxu0 0.0
    %214 = vmatpush1.msra.mxu0 0.0
    %215 = vmatprep.mubr.f32.mxu0 0.0
    %216 = vmatmul.mubr.f32.gmra.mrb[0].mxu0 %v146
    %v217 = vpop.f32.mrb[0].mxu0
    %v218 = vadd.f32 %v141, %v217
    %v219 = vpop.f32.mrb[0].mxu0
    %220 = vdwg.mxu0
    %v221 = vld [vmem:[%s4] sm:$0x1]
    %v223 = vlaneseq
    %v224 = vshrl.u32 %v223, 7
    %v225 = vsub.s32 0, %v224
    %v226 = vrot.slane %v221, %v225
    %v228 = vadd.f32 %v218, %v226
    %v229 = vmul.f32 %v228, %v228
    %v230 = vmul.f32 %v228, %v229
    %v231 = vmul.f32 %v230, 0.044715
    %v232 = vadd.f32 %v228, %v231
    %v233 = vmul.f32 %v232, 0.7978846
    %v234 = vtanh.pop %v233
    %v235 = vadd.f32 %v234, 1.0
    %v236 = vmul.f32 %v235, 0.5
    %v237 = vmul.f32 %v228, %v236
    %v238 = vld [vmem:[#allocation6] sm:$0xff]
    %v239 = vld [vmem:[#allocation6 + $0x8] sm:$0xff]
    %v240 = vld [vmem:[#allocation6 + $0x10] sm:$0xff]
    %v241 = vld [vmem:[#allocation6 + $0x18] sm:$0xff]
    %v242 = vld [vmem:[#allocation6 + $0x20] sm:$0xff]
    %v243 = vld [vmem:[#allocation6 + $0x28] sm:$0xff]
    %v244 = vld [vmem:[#allocation6 + $0x30] sm:$0xff]
    %v245 = vld [vmem:[#allocation6 + $0x38] sm:$0xff]
    %v246 = vld [vmem:[#allocation6 + $0x40] sm:$0xff]
    %v247 = vld [vmem:[#allocation6 + $0x48] sm:$0xff]
    %v248 = vld [vmem:[#allocation6 + $0x50] sm:$0xff]
    %v249 = vld [vmem:[#allocation6 + $0x58] sm:$0xff]
    %v250 = vld [vmem:[#allocation6 + $0x60] sm:$0xff]
    %v251 = vld [vmem:[#allocation6 + $0x68] sm:$0xff]
    %v252 = vld [vmem:[#allocation6 + $0x70] sm:$0xff]
    %v253 = vld [vmem:[#allocation6 + $0x78] sm:$0xff]
    %v254 = vld [vmem:[%s6] sm:$0x1]
    %v256 = vlaneseq
    %v257 = vshrl.u32 %v256, 7
    %v258 = vsub.s32 0, %v257
    %v259 = vrot.slane %v254, %v258
    %261 = vmatprep.subr.mxu0 0.0
    %262 = vmatpush1.msra.mxu0 %v238
    %263 = vmatprep.subr.mxu0 0.0
    %264 = vmatpush1.msra.mxu0 %v239
    %265 = vmatprep.subr.mxu0 0.0
    %266 = vmatpush1.msra.mxu0 %v240
    %267 = vmatprep.subr.mxu0 0.0
    %268 = vmatpush1.msra.mxu0 %v241
    %269 = vmatprep.subr.mxu0 0.0
    %270 = vmatpush1.msra.mxu0 %v242
    %271 = vmatprep.subr.mxu0 0.0
    %272 = vmatpush1.msra.mxu0 %v243
    %273 = vmatprep.subr.mxu0 0.0
    %274 = vmatpush1.msra.mxu0 %v244
    %275 = vmatprep.subr.mxu0 0.0
    %276 = vmatpush1.msra.mxu0 %v245
    %277 = vmatprep.subr.mxu0 0.0
    %278 = vmatpush1.msra.mxu0 %v246
    %279 = vmatprep.subr.mxu0 0.0
    %280 = vmatpush1.msra.mxu0 %v247
    %281 = vmatprep.subr.mxu0 0.0
    %282 = vmatpush1.msra.mxu0 %v248
    %283 = vmatprep.subr.mxu0 0.0
    %284 = vmatpush1.msra.mxu0 %v249
    %285 = vmatprep.subr.mxu0 0.0
    %286 = vmatpush1.msra.mxu0 %v250
    %287 = vmatprep.subr.mxu0 0.0
    %288 = vmatpush1.msra.mxu0 %v251
    %289 = vmatprep.subr.mxu0 0.0
    %290 = vmatpush1.msra.mxu0 %v252
    %291 = vmatprep.subr.mxu0 0.0
    %292 = vmatpush1.msra.mxu0 %v253
    %293 = vmatprep.subr.mxu0 0.0
    %294 = vmatpush1.msra.mxu0 0.0
    %295 = vmatprep.subr.mxu0 0.0
    %296 = vmatpush1.msra.mxu0 0.0
    %297 = vmatprep.subr.mxu0 0.0
    %298 = vmatpush1.msra.mxu0 0.0
    %299 = vmatprep.subr.mxu0 0.0
    %300 = vmatpush1.msra.mxu0 0.0
    %301 = vmatprep.subr.mxu0 0.0
    %302 = vmatpush1.msra.mxu0 0.0
    %303 = vmatprep.subr.mxu0 0.0
    %304 = vmatpush1.msra.mxu0 0.0
    %305 = vmatprep.subr.mxu0 0.0
    %306 = vmatpush1.msra.mxu0 0.0
    %307 = vmatprep.subr.mxu0 0.0
    %308 = vmatpush1.msra.mxu0 0.0
    %309 = vmatprep.subr.mxu0 0.0
    %310 = vmatpush1.msra.mxu0 0.0
    %311 = vmatprep.subr.mxu0 0.0
    %312 = vmatpush1.msra.mxu0 0.0
    %313 = vmatprep.subr.mxu0 0.0
    %314 = vmatpush1.msra.mxu0 0.0
    %315 = vmatprep.subr.mxu0 0.0
    %316 = vmatpush1.msra.mxu0 0.0
    %317 = vmatprep.subr.mxu0 0.0
    %318 = vmatpush1.msra.mxu0 0.0
    %319 = vmatprep.subr.mxu0 0.0
    %320 = vmatpush1.msra.mxu0 0.0
    %321 = vmatprep.subr.mxu0 0.0
    %322 = vmatpush1.msra.mxu0 0.0
    %323 = vmatprep.subr.mxu0 0.0
    %324 = vmatpush1.msra.mxu0 0.0
    %325 = vmatprep.mubr.f32.mxu0 0.0
    %326 = vmatmul.mubr.f32.gmra.mrb[0].mxu0 %v237
    %v327 = vpop.f32.mrb[0].mxu0
    %v328 = vadd.f32 %v259, %v327
    %v329 = vpop.f32.mrb[0].mxu0
    %330 = vdwg.mxu0
    %v331 = vmul.f32 %v328, %v328
    %v332 = vmul.f32 %v328, %v331
    %v333 = vmul.f32 %v332, 0.044715
    %v334 = vadd.f32 %v328, %v333
    %v335 = vmul.f32 %v334, 0.7978846
    %v336 = vtanh.pop %v335
    %v337 = vadd.f32 %v336, 1.0
    %v338 = vmul.f32 %v337, 0.5
    %v339 = vmul.f32 %v328, %v338
    %v340 = vld [vmem:[%s7] sm:$0x1]
    %v342 = vlaneseq
    %v343 = vshrl.u32 %v342, 7
    %v344 = vsub.s32 0, %v343
    %v345 = vrot.slane %v340, %v344
    %v347 = vmul.f32 %v339, %v345
    %348 = vadd.xlane.f32.xlu0 %v347
    %v349 = vpop.xlane.xlu0 %348
    %v350 = vld [vmem:[#allocation2] sm:$0x1]
    %352 = vset.pattern.permute.xlu0 0
    %353 = vperm.xlu0 %352, %v350
    %v354 = vpop.permute.xlu0 %353
    %v356 = vlaneseq
    %v357 = vshrl.u32 %v356, 7
    %v358 = vsub.s32 0, %v357
    %v359 = vrot.slane %v354, %v358
    %v360 = vadd.f32 %v349, %v359
    %v362 = vlaneseq
    %v363 = vand.u32 %v362, 127
    %v364 = vlaneseq
    %v365 = vshrl.u32 %v364, 7
    %v366 = vsub.s32 %v363, %v365
    %v367 = vrot.slane %v360, %v366
    %vm369 = vcmask 57344
    %370 = vst.msk [vmem:[#allocation8] sm:$0x1] %vm369, %v367
    // Predicated region
    $region46: #{tpu_custom_call.1} parent=1 // pred_check
      _
    $region47: #{tpu_custom_call.1} parent=1 // pred_check_branch
      %372 = sbr.rel (0) target = $region49
    $region48: #{tpu_custom_call.1} parent=1 // pred_region
      %s374 = ssub.s32 16, 16
      %375 = vsyncadd [#allocation5], %s374
      %s377 = sshll.u32 [#allocation8], 4
      %s378 = int_to_ptr.vmem [resolvable:$true] %s377
      %380 = dma.vmem_to_hbm [thread:$0]  %s378, 16, %s9, [#allocation5]
    $region49: #{tpu_custom_call.1} parent=1 // pred_fallthru
      _
    // Predicated region
    $region50: #{tpu_custom_call.1} parent=1 // pred_check
      _
    $region51: #{tpu_custom_call.1} parent=1 // pred_check_branch
      %382 = sbr.rel (0) target = $region53
    $region52: #{tpu_custom_call.1} parent=1 // pred_region
      %383 = dma.done [#allocation5], 16
    $region53: #{tpu_custom_call.1} parent=1 // pred_fallthru
      _
    %384 = vsyncpa [#allocation4], 1
    %385 = vsyncpa [#allocation7], 1
    %386 = vsyncpa [#allocation5], 1

</llo_original>
